<compile_context>
chip_gen: v7x
topology: tpu7x:2x2x1
jax: 0.10.0
libtpu: 0.0.40
codegen_flags: <defaults>
</compile_context>

<pallas_src>
import math

import numpy as np

import jax
import jax.numpy as jnp
from jax import lax
from jax.experimental import pallas as pl
from jax.experimental.pallas import tpu as pltpu

LANE = 128


def _round_up(x, m):
    return ((x + m - 1) // m) * m


# ----------------------------------------------------------------------------- host prep
def make_dft_basis_t(input_dim, n_modes):
    """Transposed real-DFT basis (float64 numpy).

    basis_t @ x reproduces torch.view_as_real(rfft(x)[..., :n_modes]) flattened:
    row 2k = cos(2*pi*k*n/N), row 2k+1 = -sin(2*pi*k*n/N).
    """
    assert n_modes <= input_dim // 2 + 1, "n_modes must be <= input_dim//2 + 1 (rfft crop)"
    n = np.arange(input_dim, dtype=np.float64)
    k = np.arange(n_modes, dtype=np.float64)
    ang = 2.0 * np.pi * np.outer(k, n) / float(input_dim)        # (n_modes, input_dim)
    return np.stack([np.cos(ang), -np.sin(ang)], axis=1).reshape(2 * n_modes, input_dim)


def prepare_params(weights, biases, n_modes, input_dim, compute_dtype=jnp.bfloat16):
    """Fold the DFT basis into the first Linear in float64, quantize weights."""
    basis = make_dft_basis_t(input_dim, n_modes)                               # f64
    w0 = np.asarray(weights[0], dtype=np.float64)                              # (out0, 2m)
    w0_folded = w0 @ basis                                                     # (out0, input_dim)
    folded = [jnp.asarray(w0_folded, dtype=compute_dtype)]
    folded += [jnp.asarray(np.asarray(w), dtype=compute_dtype) for w in weights[1:]]
    bs = [jnp.asarray(np.asarray(b), dtype=jnp.float32) for b in biases]
    return folded, bs


# ----------------------------------------------------------------------------- kernel
def _make_kernel(n_linears, compute_dtype):
    """Folded-DFT Linear + (Tanh, Linear)* MLP, feature-major activations."""

    def kernel(*refs):
        x_ref = refs[0]          # (TB, input_dim)  row-major batch tile
        out_ref = refs[-1]       # (2*n_modes, TB)  feature-major (batch on lanes)

        # Layer 0 (DFT folded in): W0' @ x^T via a trans_b matmul (contract last dims).
        x = x_ref[...].astype(compute_dtype)
        h = lax.dot_general(refs[1][...], x, (((1,), (1,)), ((), ())),
                            preferred_element_type=jnp.float32)
        h = h + refs[2][...]                                       # dense f32 bias add

        for i in range(1, n_linears):
            h = jnp.tanh(h)                                        # f32 (v5e: no bf16 VPU/EUP)
            h = jnp.dot(refs[1 + 2 * i][...], h.astype(compute_dtype),
                        preferred_element_type=jnp.float32) + refs[2 + 2 * i][...]

        out_ref[...] = h.astype(out_ref.dtype)

    return kernel


# ----------------------------------------------------------------------------- wrapper
def in_fourier_predictor(u0_batch, folded_weights, biases, *, batch_tile=2048):
    """InFourierPredictor forward with a single pallas_call.

    u0_batch       : (B, input_dim) float32
    folded_weights : list of (out_i, in_i) arrays (first one = W0 @ F_T), bf16/f32
    biases         : list of (out_i,) float32
    returns        : (B, 2*n_modes) float32
    """
    B, input_dim = u0_batch.shape
    assert folded_weights[0].shape[1] == input_dim
    two_modes = folded_weights[-1].shape[0]
    n_linears = len(folded_weights)
    compute_dtype = folded_weights[0].dtype
    out_dims = [w.shape[0] for w in folded_weights]

    # Batch tile: batch sits on the 128-lane axis of activations/output.
    tile_cfg = _round_up(max(int(batch_tile), 1), LANE)
    if B >= LANE:
        tile = min(tile_cfg, (B // LANE) * LANE)      # multiple of 128, <= B
    else:
        tile = B                                      # full (tiny) batch in one block

    # VMEM accounting (generation-aware cap; no artificial 32 MiB floor).
    w_bytes = sum(int(np.prod(w.shape)) * jnp.dtype(w.dtype).itemsize for w in folded_weights)

    def vmem_needed(t):
        io = t * (input_dim + two_modes) * 4           # x tile + out tile (f32)
        bias = sum(out_dims) * t * 4                   # pre-broadcast biases (f32)
        act = 2 * max(out_dims) * t * 4                # in-flight activations
        return 2 * (io + bias + w_bytes) + act         # double-buffered operands

    try:
        vmem_cap = int(pltpu.get_tpu_info().vmem_capacity_bytes)
    except Exception:
        vmem_cap = 64 * 1024 * 1024                    # conservative (v7x per-core)
    budget = min((vmem_cap * 3) // 4, 96 * 1024 * 1024)
    while tile > LANE and vmem_needed(tile) > budget:
        tile = max(LANE, (tile // 2) // LANE * LANE)

    b_out = _round_up(B, tile)
    grid = (b_out // tile,)

    x = u0_batch.astype(jnp.float32)
    args = [x]
    in_specs = [pl.BlockSpec((tile, input_dim), lambda i: (i, 0))]   # row-major batch tile
    for w, b, dout in zip(folded_weights, biases, out_dims):
        b_full = jnp.broadcast_to(jnp.asarray(b, jnp.float32).reshape(-1, 1), (dout, tile))
        args += [w, b_full]
        # NOTE: grid-invariant operands; pipeline_mode=pl.Buffered(1) would halve their
        # VMEM at large widths, but the saving is negligible at these dims.
        in_specs += [pl.BlockSpec(w.shape, lambda i: (0, 0)),
                     pl.BlockSpec((dout, tile), lambda i: (0, 0))]
    out_spec = pl.BlockSpec((two_modes, tile), lambda i: (0, i))

    # Advisory cost estimate for the XLA scheduler.
    in_dims = [input_dim] + out_dims[:-1]
    flops = 2 * b_out * sum(di * do for di, do in zip(in_dims, out_dims))
    transcendentals = b_out * sum(out_dims[:-1])
    bytes_accessed = 4 * B * input_dim + 4 * b_out * two_modes + w_bytes + 4 * sum(out_dims) * tile
    cost = pl.CostEstimate(flops=int(flops), transcendentals=int(transcendentals),
                           bytes_accessed=int(bytes_accessed))

    vmem_limit = int(min(vmem_needed(tile) + (8 << 20), 120 * 1024 * 1024))

    kernel = _make_kernel(n_linears, compute_dtype)
    out_fm = pl.pallas_call(
        kernel,
        out_shape=jax.ShapeDtypeStruct((two_modes, b_out), jnp.float32),
        grid_spec=pltpu.PrefetchScalarGridSpec(
            num_scalar_prefetch=0,
            grid=grid,
            in_specs=in_specs,
            out_specs=out_spec,
        ),
        compiler_params=pltpu.CompilerParams(
            dimension_semantics=("parallel",),
            vmem_limit_bytes=vmem_limit,
        ),
        cost_estimate=cost,
    )(*args)

    # Padded (garbage) batch columns are sliced off here, before any downstream use.
    return out_fm.T[:B]                                # (B, 2*n_modes)


# ----------------------------------------------------------------------------- references
def init_params(key, n_layers, layer_width, n_modes):
    """PyTorch-Linear-style init, stored in PyTorch (out, in) layout."""
    widths = [2 * n_modes] + [layer_width] * n_layers + [2 * n_modes]
    weights, biases = [], []
    for din, dout in zip(widths[:-1], widths[1:]):
        key, kw, kb = jax.random.split(key, 3)
        bound = 1.0 / math.sqrt(din)
        weights.append(jax.random.uniform(kw, (dout, din), jnp.float32, -bound, bound))
        biases.append(jax.random.uniform(kb, (dout,), jnp.float32, -bound, bound))
    return weights, biases


def reference_forward_fft(u0_batch, n_modes, weights, biases):
    """Pure-JAX f32 reference with the true rfft path (matches PyTorch semantics)."""
    fft = jnp.fft.rfft(u0_batch.astype(jnp.float32), axis=-1)[:, :n_modes]
    h = jnp.stack([fft.real, fft.imag], axis=-1).reshape(u0_batch.shape[0], -1)
    for i, (w, b) in enumerate(zip(weights, biases)):
        if i > 0:
            h = jnp.tanh(h)
        h = h @ jnp.asarray(w, jnp.float32).T + jnp.asarray(b, jnp.float32)[None, :]
    return h


def reference_forward_folded(u0_batch, folded_weights, biases):
    """Pure-JAX reference mirroring the kernel's exact arithmetic (fold + bf16 dots)."""
    h = u0_batch.astype(jnp.float32)
    for i, (w, b) in enumerate(zip(folded_weights, biases)):
        if i > 0:
            h = jnp.tanh(h)
        h = jnp.dot(h.astype(w.dtype), w.T, preferred_element_type=jnp.float32)
        h = h + jnp.asarray(b, jnp.float32)[None, :]
    return h


# ----------------------------------------------------------------------------- self-test
if __name__ == "__main__":
    n_layers = 2
    layer_width = 32
    n_modes = 8          # 2*n_modes = 16 Fourier features / output dim
    input_dim = 16       # rfft length = 9 >= n_modes, so the crop is well-defined
    batch = 16

    key = jax.random.PRNGKey(0)
    key, kx, kp = jax.random.split(key, 3)

    u0_batch = jax.random.normal(kx, (batch, input_dim), dtype=jnp.float32)
    weights, biases = init_params(kp, n_layers, layer_width, n_modes)

    folded_w, bias_list = prepare_params(weights, biases, n_modes, input_dim,
                                         compute_dtype=jnp.bfloat16)

    out = in_fourier_predictor(u0_batch, folded_w, bias_list, batch_tile=2048)
    out = jax.block_until_ready(out)
    assert out.shape == (batch, 2 * n_modes)

    # 1) Plumbing check: mirror the exact folded/quantized arithmetic in pure JAX.
    ref_exact = reference_forward_folded(u0_batch, folded_w, bias_list)
    err = float(jnp.max(jnp.abs(out - ref_exact)))
    assert err < 1e-3, f"kernel vs mirrored reference: max abs err {err}"

    # 2) Semantic check vs the true rfft-based model (f32 weights, no fold/quant);
    #    tolerance sized for the intentional bf16 operand quantization.
    ref_true = reference_forward_fft(u0_batch, n_modes, weights, biases)
    scale = 1.0 + float(jnp.max(jnp.abs(ref_true)))
    err2 = float(jnp.max(jnp.abs(out - ref_true)))
    assert err2 < 5e-2 * scale, f"kernel vs rfft reference: max abs err {err2}"

    print("KERNEL_OK")
</pallas_src>

<mosaic_0001>
module attributes {stable_mosaic.version = 11 : i64} {
  func.func @kernel(%arg0: i32, %arg1: memref<16x16xf32, #tpu.memory_space<vmem>>, %arg2: memref<32x16xbf16, #tpu.memory_space<vmem>>, %arg3: memref<32x16xf32, #tpu.memory_space<vmem>>, %arg4: memref<32x32xbf16, #tpu.memory_space<vmem>>, %arg5: memref<32x16xf32, #tpu.memory_space<vmem>>, %arg6: memref<16x32xbf16, #tpu.memory_space<vmem>>, %arg7: memref<16x16xf32, #tpu.memory_space<vmem>>, %arg8: memref<16x16xf32, #tpu.memory_space<vmem>>) attributes {dimension_semantics = [#tpu.dimension_semantics<parallel>], iteration_bounds = array<i64: 1>, scalar_prefetch = 0 : i64, scratch_operands = 0 : i64, tpu.core_type = #tpu.core_type<tc>, window_params = [{transform_indices = @transform_0, window_bounds = array<i64: 16, 16>}, {pipeline_mode = #tpu.pipeline_mode<synchronous>, transform_indices = @transform_1, window_bounds = array<i64: 32, 16>}, {pipeline_mode = #tpu.pipeline_mode<synchronous>, transform_indices = @transform_2, window_bounds = array<i64: 32, 16>}, {pipeline_mode = #tpu.pipeline_mode<synchronous>, transform_indices = @transform_3, window_bounds = array<i64: 32, 32>}, {pipeline_mode = #tpu.pipeline_mode<synchronous>, transform_indices = @transform_4, window_bounds = array<i64: 32, 16>}, {pipeline_mode = #tpu.pipeline_mode<synchronous>, transform_indices = @transform_5, window_bounds = array<i64: 16, 32>}, {pipeline_mode = #tpu.pipeline_mode<synchronous>, transform_indices = @transform_6, window_bounds = array<i64: 16, 16>}, {transform_indices = @transform_7, window_bounds = array<i64: 16, 16>}]} {
    %c0 = arith.constant 0 : index
    %c0_0 = arith.constant 0 : index
    %0 = vector.load %arg1[%c0, %c0_0] : memref<16x16xf32, #tpu.memory_space<vmem>>, vector<16x16xf32>
    %1 = arith.truncf %0 : vector<16x16xf32> to vector<16x16xbf16>
    %c0_1 = arith.constant 0 : index
    %c0_2 = arith.constant 0 : index
    %2 = vector.load %arg2[%c0_1, %c0_2] : memref<32x16xbf16, #tpu.memory_space<vmem>>, vector<32x16xbf16>
    %cst = arith.constant dense<0.000000e+00> : vector<32x16xf32>
    %3 = tpu.matmul %2, %1, %cst {dimension_numbers = #tpu.dot_dimension_numbers<[1], [1], [0], [0], [0, 0, 1, 0], [], []>} : vector<32x16xbf16>, vector<16x16xbf16>, vector<32x16xf32> -> vector<32x16xf32>
    %c0_3 = arith.constant 0 : index
    %c0_4 = arith.constant 0 : index
    %4 = vector.load %arg3[%c0_3, %c0_4] : memref<32x16xf32, #tpu.memory_space<vmem>>, vector<32x16xf32>
    %5 = arith.addf %3, %4 : vector<32x16xf32>
    %6 = math.tanh %5 : vector<32x16xf32>
    %c0_5 = arith.constant 0 : index
    %c0_6 = arith.constant 0 : index
    %7 = vector.load %arg4[%c0_5, %c0_6] : memref<32x32xbf16, #tpu.memory_space<vmem>>, vector<32x32xbf16>
    %8 = arith.truncf %6 : vector<32x16xf32> to vector<32x16xbf16>
    %cst_7 = arith.constant dense<0.000000e+00> : vector<32x16xf32>
    %9 = tpu.matmul %7, %8, %cst_7 {dimension_numbers = #tpu.dot_dimension_numbers<[1], [0], [0], [1], [0, 0, 1, 1], [], []>} : vector<32x32xbf16>, vector<32x16xbf16>, vector<32x16xf32> -> vector<32x16xf32>
    %c0_8 = arith.constant 0 : index
    %c0_9 = arith.constant 0 : index
    %10 = vector.load %arg5[%c0_8, %c0_9] : memref<32x16xf32, #tpu.memory_space<vmem>>, vector<32x16xf32>
    %11 = arith.addf %9, %10 : vector<32x16xf32>
    %12 = math.tanh %11 : vector<32x16xf32>
    %c0_10 = arith.constant 0 : index
    %c0_11 = arith.constant 0 : index
    %13 = vector.load %arg6[%c0_10, %c0_11] : memref<16x32xbf16, #tpu.memory_space<vmem>>, vector<16x32xbf16>
    %14 = arith.truncf %12 : vector<32x16xf32> to vector<32x16xbf16>
    %cst_12 = arith.constant dense<0.000000e+00> : vector<16x16xf32>
    %15 = tpu.matmul %13, %14, %cst_12 {dimension_numbers = #tpu.dot_dimension_numbers<[1], [0], [0], [1], [0, 0, 1, 1], [], []>} : vector<16x32xbf16>, vector<32x16xbf16>, vector<16x16xf32> -> vector<16x16xf32>
    %c0_13 = arith.constant 0 : index
    %c0_14 = arith.constant 0 : index
    %16 = vector.load %arg7[%c0_13, %c0_14] : memref<16x16xf32, #tpu.memory_space<vmem>>, vector<16x16xf32>
    %17 = arith.addf %15, %16 : vector<16x16xf32>
    %c0_15 = arith.constant 0 : index
    %c0_16 = arith.constant 0 : index
    %18 = vector.load %arg8[%c0_15, %c0_16] : memref<16x16xf32, #tpu.memory_space<vmem>>, vector<16x16xf32>
    tpu.vector_store %arg8[%c0_15, %c0_16], %17 {strides = array<i32>} : memref<16x16xf32, #tpu.memory_space<vmem>>, vector<16x16xf32>,
    return
  }
  func.func @transform_0(%arg0: i32) -> (i32, i32) {
    %c0_i32 = arith.constant 0 : i32
    %c0_i32_0 = arith.constant 0 : i32
    return %arg0, %c0_i32 : i32, i32
  }
  func.func @transform_1(%arg0: i32) -> (i32, i32) {
    %c0_i32 = arith.constant 0 : i32
    %c0_i32_0 = arith.constant 0 : i32
    %c0_i32_1 = arith.constant 0 : i32
    return %c0_i32, %c0_i32_0 : i32, i32
  }
  func.func @transform_2(%arg0: i32) -> (i32, i32) {
    %c0_i32 = arith.constant 0 : i32
    %c0_i32_0 = arith.constant 0 : i32
    %c0_i32_1 = arith.constant 0 : i32
    return %c0_i32, %c0_i32_0 : i32, i32
  }
  func.func @transform_3(%arg0: i32) -> (i32, i32) {
    %c0_i32 = arith.constant 0 : i32
    %c0_i32_0 = arith.constant 0 : i32
    %c0_i32_1 = arith.constant 0 : i32
    return %c0_i32, %c0_i32_0 : i32, i32
  }
  func.func @transform_4(%arg0: i32) -> (i32, i32) {
    %c0_i32 = arith.constant 0 : i32
    %c0_i32_0 = arith.constant 0 : i32
    %c0_i32_1 = arith.constant 0 : i32
    return %c0_i32, %c0_i32_0 : i32, i32
  }
  func.func @transform_5(%arg0: i32) -> (i32, i32) {
    %c0_i32 = arith.constant 0 : i32
    %c0_i32_0 = arith.constant 0 : i32
    %c0_i32_1 = arith.constant 0 : i32
    return %c0_i32, %c0_i32_0 : i32, i32
  }
  func.func @transform_6(%arg0: i32) -> (i32, i32) {
    %c0_i32 = arith.constant 0 : i32
    %c0_i32_0 = arith.constant 0 : i32
    %c0_i32_1 = arith.constant 0 : i32
    return %c0_i32, %c0_i32_0 : i32, i32
  }
  func.func @transform_7(%arg0: i32) -> (i32, i32) {
    %c0_i32 = arith.constant 0 : i32
    %c0_i32_0 = arith.constant 0 : i32
    return %c0_i32, %arg0 : i32, i32
  }
}

</mosaic_0001>

<llo_original>
// kernel: tpu_custom_call.1
$region0: #{tpu_custom_call.1}
  #allocation0 [shape = 'u32[]', space=smem, size = 0x4, offset = 0x4, fixed_abs, tag = 'smem constant byte address 0x4 - core index']
  #allocation1 [shape = 'u32[144,128]{1,0:T(1,128)}', space=vmem, size = 0x12000, scoped, tag = 'internal scratch']
  %s0 = inlined_call_operand.vmem [shape: f32[16,16], index: 0, kind: input, shape index: {}]
  %s1 = inlined_call_operand.vmem [shape: bf16[32,16], index: 1, kind: input, shape index: {}]
  %s2 = inlined_call_operand.vmem [shape: f32[32,16], index: 2, kind: input, shape index: {}]
  %s3 = inlined_call_operand.vmem [shape: bf16[32,32], index: 3, kind: input, shape index: {}]
  %s4 = inlined_call_operand.vmem [shape: f32[32,16], index: 4, kind: input, shape index: {}]
  %s5 = inlined_call_operand.vmem [shape: bf16[16,32], index: 5, kind: input, shape index: {}]
  %s6 = inlined_call_operand.vmem [shape: f32[16,16], index: 6, kind: input, shape index: {}]
  %s7 = inlined_call_operand.hbm [shape: f32[16,16], index: 7, kind: output, shape index: {}]
  %s8 = sld [smem:[#allocation0]]
  $region38: #{tpu_custom_call.1} parent=0
    _
  %s10 = ssub.s32 1, %s8
  %s11 = scalar_select 0, %s10, %s8
  $region1: #{tpu_custom_call.1} parent=0
    #allocation2 [shape = 'u8[8192]{0}', space=vmem, size = 0x2000, scoped, tag = 'output window, operand 0, single buffered']
    #allocation3 [shape = 's32[1]{0}', space=sflag, size = 0x4, scoped, tag = 'scoped memory for tpu_custom_call.1']
    %12 = vsyncpa [#allocation3], 0
    // Predicated region
    $region2: #{tpu_custom_call.1} parent=1 // pred_check
      _
    $region3: #{tpu_custom_call.1} parent=1 // pred_check_branch
      %14 = sbr.rel (0) target = $region5
    $region4: #{tpu_custom_call.1} parent=1 // pred_region
      _
    $region5: #{tpu_custom_call.1} parent=1 // pred_fallthru
      _
    // Predicated region
    $region6: #{tpu_custom_call.1} parent=1 // pred_check
      _
    $region7: #{tpu_custom_call.1} parent=1 // pred_check_branch
      %16 = sbr.rel (0) target = $region9
    $region8: #{tpu_custom_call.1} parent=1 // pred_region
      _
    $region9: #{tpu_custom_call.1} parent=1 // pred_fallthru
      _
    // Predicated region
    $region10: #{tpu_custom_call.1} parent=1 // pred_check
      _
    $region11: #{tpu_custom_call.1} parent=1 // pred_check_branch
      %18 = sbr.rel (0) target = $region13
    $region12: #{tpu_custom_call.1} parent=1 // pred_region
      _
    $region13: #{tpu_custom_call.1} parent=1 // pred_fallthru
      _
    // Predicated region
    $region14: #{tpu_custom_call.1} parent=1 // pred_check
      _
    $region15: #{tpu_custom_call.1} parent=1 // pred_check_branch
      %20 = sbr.rel (0) target = $region17
    $region16: #{tpu_custom_call.1} parent=1 // pred_region
      _
    $region17: #{tpu_custom_call.1} parent=1 // pred_fallthru
      _
    // Predicated region
    $region18: #{tpu_custom_call.1} parent=1 // pred_check
      _
    $region19: #{tpu_custom_call.1} parent=1 // pred_check_branch
      %22 = sbr.rel (0) target = $region21
    $region20: #{tpu_custom_call.1} parent=1 // pred_region
      _
    $region21: #{tpu_custom_call.1} parent=1 // pred_fallthru
      _
    // Predicated region
    $region22: #{tpu_custom_call.1} parent=1 // pred_check
      _
    $region23: #{tpu_custom_call.1} parent=1 // pred_check_branch
      %24 = sbr.rel (0) target = $region25
    $region24: #{tpu_custom_call.1} parent=1 // pred_region
      _
    $region25: #{tpu_custom_call.1} parent=1 // pred_fallthru
      _
    // Predicated region
    $region26: #{tpu_custom_call.1} parent=1 // pred_check
      _
    $region27: #{tpu_custom_call.1} parent=1 // pred_check_branch
      %26 = sbr.rel (0) target = $region29
    $region28: #{tpu_custom_call.1} parent=1 // pred_region
      _
    $region29: #{tpu_custom_call.1} parent=1 // pred_fallthru
      _
    %v28 = vld [vmem:[%s0] sm:$0xff]
    %v29 = vld [vmem:[%s0 + $0x8] sm:$0xff]
    %v30 = vpack.c.bf16 %v29, %v28
    %v31 = vld [vmem:[%s1] sm:$0xf]
    %v32 = vld [vmem:[%s1 + $0x4] sm:$0xf]
    %v33 = vld [vmem:[%s1 + $0x8] sm:$0xf]
    %v34 = vld [vmem:[%s1 + $0xc] sm:$0xf]
    %v35 = vld [vmem:[%s2] sm:$0xff]
    %v36 = vld [vmem:[%s2 + $0x8] sm:$0xff]
    %v37 = vld [vmem:[%s2 + $0x10] sm:$0xff]
    %v38 = vld [vmem:[%s2 + $0x18] sm:$0xff]
    %v43 = vunpack.c.l.b16 %v31
    %v44 = vunpack.c.l.b16 %v32
    %v45 = vunpack.c.l.b16 %v33
    %v46 = vunpack.c.l.b16 %v34
    %v47 = vpack.c.b16 %v44, %v43
    %v48 = vpack.c.b16 %v46, %v45
    %vm49 = vcmask 130048
    %v51 = vsel %vm49, %v47, 0
    %v54 = vsel %vm49, %v48, 0
    %v57 = vsel %vm49, %v30, 0
    %59 = vmatprep.subr.bf16.mxu0 0
    %60 = vmatpush1.bf16.xpose.msra.mxu0 %v57
    %61 = vmatprep.subr.bf16.mxu0 0
    %62 = vmatpush1.bf16.xpose.msra.mxu0 0
    %63 = vmatprep.subr.bf16.mxu0 0
    %64 = vmatpush1.bf16.xpose.msra.mxu0 0
    %65 = vmatprep.subr.bf16.mxu0 0
    %66 = vmatpush1.bf16.xpose.msra.mxu0 0
    %67 = vmatprep.subr.bf16.mxu0 0
    %68 = vmatpush1.bf16.xpose.msra.mxu0 0
    %69 = vmatprep.subr.bf16.mxu0 0
    %70 = vmatpush1.bf16.xpose.msra.mxu0 0
    %71 = vmatprep.subr.bf16.mxu0 0
    %72 = vmatpush1.bf16.xpose.msra.mxu0 0
    %73 = vmatprep.subr.bf16.mxu0 0
    %74 = vmatpush1.bf16.xpose.msra.mxu0 0
    %75 = vmatprep.subr.bf16.mxu0 0
    %76 = vmatpush1.bf16.xpose.msra.mxu0 0
    %77 = vmatprep.subr.bf16.mxu0 0
    %78 = vmatpush1.bf16.xpose.msra.mxu0 0
    %79 = vmatprep.subr.bf16.mxu0 0
    %80 = vmatpush1.bf16.xpose.msra.mxu0 0
    %81 = vmatprep.subr.bf16.mxu0 0
    %82 = vmatpush1.bf16.xpose.msra.mxu0 0
    %83 = vmatprep.subr.bf16.mxu0 0
    %84 = vmatpush1.bf16.xpose.msra.mxu0 0
    %85 = vmatprep.subr.bf16.mxu0 0
    %86 = vmatpush1.bf16.xpose.msra.mxu0 0
    %87 = vmatprep.subr.bf16.mxu0 0
    %88 = vmatpush1.bf16.xpose.msra.mxu0 0
    %89 = vmatprep.subr.bf16.mxu0 0
    %90 = vmatpush1.bf16.xpose.msra.mxu0 0
    %91 = vmatprep.mubr.bf16.mxu0 0
    %92 = vmatmul.mubr.bf16.gmra.mrb[0].mxu0 %v51
    %v93 = vpop.f32.mrb[0].mxu0
    %v94 = vadd.f32 %v35, %v93
    %v95 = vpop.f32.mrb[0].mxu0
    %v96 = vpop.f32.mrb[0].mxu0
    %v97 = vadd.f32 %v36, %v96
    %v98 = vpop.f32.mrb[0].mxu0
    %99 = vmatprep.mubr.bf16.mxu0 0
    %100 = vmatmul.mubr.bf16.gmra.mrb[0].mxu0 %v54
    %v101 = vpop.f32.mrb[0].mxu0
    %v102 = vadd.f32 %v37, %v101
    %v103 = vpop.f32.mrb[0].mxu0
    %v104 = vpop.f32.mrb[0].mxu0
    %v105 = vadd.f32 %v38, %v104
    %v106 = vpop.f32.mrb[0].mxu0
    %107 = vdwg.mxu0
    %v108 = vtanh.pop %v94
    %v109 = vtanh.pop %v97
    %v110 = vtanh.pop %v102
    %v111 = vtanh.pop %v105
    %v112 = vld [vmem:[%s3] sm:$0xf]
    %v113 = vld [vmem:[%s3 + $0x4] sm:$0xf]
    %v114 = vld [vmem:[%s3 + $0x8] sm:$0xf]
    %v115 = vld [vmem:[%s3 + $0xc] sm:$0xf]
    %v116 = vpack.c.bf16 %v109, %v108
    %v117 = vpack.c.bf16 %v111, %v110
    %v118 = vld [vmem:[%s4] sm:$0xff]
    %v119 = vld [vmem:[%s4 + $0x8] sm:$0xff]
    %v120 = vld [vmem:[%s4 + $0x10] sm:$0xff]
    %v121 = vld [vmem:[%s4 + $0x18] sm:$0xff]
    %v126 = vunpack.c.l.b16 %v112
    %v127 = vunpack.c.l.b16 %v113
    %v128 = vunpack.c.l.b16 %v114
    %v129 = vunpack.c.l.b16 %v115
    %v130 = vpack.c.b16 %v127, %v126
    %v131 = vpack.c.b16 %v129, %v128
    %vm132 = vcmask 261120
    %v134 = vsel %vm132, %v130, 0
    %v137 = vsel %vm132, %v131, 0
    %139 = vmatprep.subr.bf16.mxu0 0
    %140 = vmatpush1.bf16.msra.mxu0 %v116
    %141 = vmatprep.subr.bf16.mxu0 0
    %142 = vmatpush1.bf16.msra.mxu0 %v117
    %143 = vmatprep.subr.bf16.mxu0 0
    %144 = vmatpush1.bf16.msra.mxu0 0
    %145 = vmatprep.subr.bf16.mxu0 0
    %146 = vmatpush1.bf16.msra.mxu0 0
    %147 = vmatprep.subr.bf16.mxu0 0
    %148 = vmatpush1.bf16.msra.mxu0 0
    %149 = vmatprep.subr.bf16.mxu0 0
    %150 = vmatpush1.bf16.msra.mxu0 0
    %151 = vmatprep.subr.bf16.mxu0 0
    %152 = vmatpush1.bf16.msra.mxu0 0
    %153 = vmatprep.subr.bf16.mxu0 0
    %154 = vmatpush1.bf16.msra.mxu0 0
    %155 = vmatprep.subr.bf16.mxu0 0
    %156 = vmatpush1.bf16.msra.mxu0 0
    %157 = vmatprep.subr.bf16.mxu0 0
    %158 = vmatpush1.bf16.msra.mxu0 0
    %159 = vmatprep.subr.bf16.mxu0 0
    %160 = vmatpush1.bf16.msra.mxu0 0
    %161 = vmatprep.subr.bf16.mxu0 0
    %162 = vmatpush1.bf16.msra.mxu0 0
    %163 = vmatprep.subr.bf16.mxu0 0
    %164 = vmatpush1.bf16.msra.mxu0 0
    %165 = vmatprep.subr.bf16.mxu0 0
    %166 = vmatpush1.bf16.msra.mxu0 0
    %167 = vmatprep.subr.bf16.mxu0 0
    %168 = vmatpush1.bf16.msra.mxu0 0
    %169 = vmatprep.subr.bf16.mxu0 0
    %170 = vmatpush1.bf16.msra.mxu0 0
    %171 = vmatprep.mubr.bf16.mxu0 0
    %172 = vmatmul.mubr.bf16.gmra.mrb[0].mxu0 %v134
    %v173 = vpop.f32.mrb[0].mxu0
    %v174 = vadd.f32 %v118, %v173
    %v175 = vpop.f32.mrb[0].mxu0
    %v176 = vpop.f32.mrb[0].mxu0
    %v177 = vadd.f32 %v119, %v176
    %v178 = vpop.f32.mrb[0].mxu0
    %179 = vmatprep.mubr.bf16.mxu0 0
    %180 = vmatmul.mubr.bf16.gmra.mrb[0].mxu0 %v137
    %v181 = vpop.f32.mrb[0].mxu0
    %v182 = vadd.f32 %v120, %v181
    %v183 = vpop.f32.mrb[0].mxu0
    %v184 = vpop.f32.mrb[0].mxu0
    %v185 = vadd.f32 %v121, %v184
    %v186 = vpop.f32.mrb[0].mxu0
    %187 = vdwg.mxu0
    %v188 = vtanh.pop %v174
    %v189 = vtanh.pop %v177
    %v190 = vtanh.pop %v182
    %v191 = vtanh.pop %v185
    %v192 = vld [vmem:[%s5] sm:$0xf]
    %v193 = vld [vmem:[%s5 + $0x4] sm:$0xf]
    %v194 = vpack.c.bf16 %v189, %v188
    %v195 = vpack.c.bf16 %v191, %v190
    %v196 = vld [vmem:[%s6] sm:$0xff]
    %v197 = vld [vmem:[%s6 + $0x8] sm:$0xff]
    %v200 = vunpack.c.l.b16 %v192
    %v201 = vunpack.c.l.b16 %v193
    %v202 = vpack.c.b16 %v201, %v200
    %v204 = vsel %vm132, %v202, 0
    %206 = vmatprep.subr.bf16.mxu0 0
    %207 = vmatpush1.bf16.msra.mxu0 %v194
    %208 = vmatprep.subr.bf16.mxu0 0
    %209 = vmatpush1.bf16.msra.mxu0 %v195
    %210 = vmatprep.subr.bf16.mxu0 0
    %211 = vmatpush1.bf16.msra.mxu0 0
    %212 = vmatprep.subr.bf16.mxu0 0
    %213 = vmatpush1.bf16.msra.mxu0 0
    %214 = vmatprep.subr.bf16.mxu0 0
    %215 = vmatpush1.bf16.msra.mxu0 0
    %216 = vmatprep.subr.bf16.mxu0 0
    %217 = vmatpush1.bf16.msra.mxu0 0
    %218 = vmatprep.subr.bf16.mxu0 0
    %219 = vmatpush1.bf16.msra.mxu0 0
    %220 = vmatprep.subr.bf16.mxu0 0
    %221 = vmatpush1.bf16.msra.mxu0 0
    %222 = vmatprep.subr.bf16.mxu0 0
    %223 = vmatpush1.bf16.msra.mxu0 0
    %224 = vmatprep.subr.bf16.mxu0 0
    %225 = vmatpush1.bf16.msra.mxu0 0
    %226 = vmatprep.subr.bf16.mxu0 0
    %227 = vmatpush1.bf16.msra.mxu0 0
    %228 = vmatprep.subr.bf16.mxu0 0
    %229 = vmatpush1.bf16.msra.mxu0 0
    %230 = vmatprep.subr.bf16.mxu0 0
    %231 = vmatpush1.bf16.msra.mxu0 0
    %232 = vmatprep.subr.bf16.mxu0 0
    %233 = vmatpush1.bf16.msra.mxu0 0
    %234 = vmatprep.subr.bf16.mxu0 0
    %235 = vmatpush1.bf16.msra.mxu0 0
    %236 = vmatprep.subr.bf16.mxu0 0
    %237 = vmatpush1.bf16.msra.mxu0 0
    %238 = vmatprep.mubr.bf16.mxu0 0
    %239 = vmatmul.mubr.bf16.gmra.mrb[0].mxu0 %v204
    %v240 = vpop.f32.mrb[0].mxu0
    %v241 = vadd.f32 %v196, %v240
    %v242 = vpop.f32.mrb[0].mxu0
    %v243 = vpop.f32.mrb[0].mxu0
    %v244 = vadd.f32 %v197, %v243
    %v245 = vpop.f32.mrb[0].mxu0
    %246 = vdwg.mxu0
    %247 = vst.msk [vmem:[#allocation2] sm:$0xff] %vm49, %v241
    %248 = vst.msk [vmem:[#allocation2 + $0x8] sm:$0xff] %vm49, %v244
    // Predicated region
    $region30: #{tpu_custom_call.1} parent=1 // pred_check
      _
    $region31: #{tpu_custom_call.1} parent=1 // pred_check_branch
      %250 = sbr.rel (0) target = $region33
    $region32: #{tpu_custom_call.1} parent=1 // pred_region
      %s252 = ssub.s32 256, 256
      %253 = vsyncadd [#allocation3], %s252
      %s254 = sshll.u32 [#allocation2], 4
      %s255 = int_to_ptr.vmem [resolvable:$true] %s254
      %260 = dma.vmem_to_hbm [thread:$0]  %s255, 256, %s7, [#allocation3], 128, 128, 8
    $region33: #{tpu_custom_call.1} parent=1 // pred_fallthru
      _
    // Predicated region
    $region34: #{tpu_custom_call.1} parent=1 // pred_check
      _
    $region35: #{tpu_custom_call.1} parent=1 // pred_check_branch
      %262 = sbr.rel (0) target = $region37
    $region36: #{tpu_custom_call.1} parent=1 // pred_region
      %263 = dma.done [#allocation3], 256
    $region37: #{tpu_custom_call.1} parent=1 // pred_fallthru
      _
    %264 = vsyncpa [#allocation3], 1

</llo_original>
